<compile_context>
chip_gen: v6e
topology: v6e:2x2x1
jax: 0.10.0
libtpu: 0.0.40
codegen_flags: <defaults>
</compile_context>

<pallas_src>
import math

import jax
import jax.numpy as jnp
from jax.experimental import pallas as pl
from jax.experimental.pallas import tpu as pltpu

EPS = 1e-5
NEG_SLOPE = 0.1
_VMEM_FLOOR = 8 * 1024 * 1024
_VMEM_CAP = 40 * 1024 * 1024        # headroom for v7x (64 MiB physical VMEM)


def _round_up(x, m):
    return ((x + m - 1) // m) * m


def _vmem_limit(nbytes):
    return int(min(max(nbytes + (2 << 20), _VMEM_FLOOR), _VMEM_CAP))


def _choose_row_tile(rows, target=2048):
    """Largest multiple of 8 that divides `rows` and is <= target (rows % 8 == 0)."""
    cap = max(8, min(rows, target))
    t = (cap // 8) * 8
    while t > 8:
        if rows % t == 0:
            return t
        t -= 8
    return 8


# ----------------------------------------------------------------------------
# Pass 1: conv-as-matmul (bf16 MXU operands, f32 accumulate) + per-tile partial
# BatchNorm statistics.  Every output block is written exactly once per grid
# step -> the grid is truly parallel (can shard across TensorCores).
# ----------------------------------------------------------------------------
def conv_stats_kernel(p_ref, w_ref, y_ref, psum_ref, pssq_ref):
    y = jnp.dot(p_ref[...], w_ref[...], preferred_element_type=jnp.float32)
    y_ref[...] = y
    s = jnp.sum(y, axis=0, keepdims=True)        # (1, Cout)
    q = jnp.sum(y * y, axis=0, keepdims=True)    # (1, Cout)
    # Broadcast into the sublane-aligned (8, Cout) partial tile; the wrapper
    # reads row 0 of each tile.
    psum_ref[...] = jnp.broadcast_to(s, psum_ref.shape)
    pssq_ref[...] = jnp.broadcast_to(q, pssq_ref.shape)


# ----------------------------------------------------------------------------
# Pass 2: y * scale + shift, then LeakyReLU(0.1).  scale/shift are precomputed
# per channel, pre-tiled to 128 lanes, so this is a pure full-lane mem-bound
# elementwise pass.
# ----------------------------------------------------------------------------
def bn_lrelu_kernel(y_ref, scale_ref, shift_ref, o_ref):
    y = y_ref[...] * scale_ref[...] + shift_ref[...]
    o_ref[...] = jnp.where(y > 0, y, NEG_SLOPE * y)


def _im2col(x_nhwc, kh=4, kw=4, stride=2, pad=1):
    N, H, W, C = x_nhwc.shape
    xp = jnp.pad(x_nhwc, ((0, 0), (pad, pad), (pad, pad), (0, 0)))
    Ho = (H + 2 * pad - kh) // stride + 1
    Wo = (W + 2 * pad - kw) // stride + 1
    cols = []
    for i in range(kh):
        for j in range(kw):
            cols.append(xp[:, i:i + stride * Ho:stride, j:j + stride * Wo:stride, :])
    p = jnp.stack(cols, axis=3)                   # (N, Ho, Wo, kh*kw, C)
    return p.reshape(N * Ho * Wo, kh * kw * C), Ho, Wo


def down_light_forward(x_nchw, weight_hwio, bias, gamma, beta,
                       tm_target=1024, use_bf16=True):
    """weight_hwio: (4, 4, Cin, Cout).  Returns NCHW output.

    `bias` is accepted for parity with the PyTorch module but intentionally
    unused: training-mode BatchNorm cancels the conv bias exactly.
    """
    del bias
    N, Cin, H, W = x_nchw.shape
    Cout = weight_hwio.shape[-1]

    # TODO(synk): if the surrounding model keeps activations NHWC, drop the two
    # NCHW<->NHWC transposes; for very large inputs replace the materialized
    # im2col with an in-kernel reduction over the 16 conv taps.
    x_nhwc = jnp.transpose(x_nchw, (0, 2, 3, 1)).astype(jnp.float32)
    patches, Ho, Wo = _im2col(x_nhwc)
    M, K = patches.shape

    lane_dense = (Cout <= 128) and (128 % Cout == 0)
    lane_rep = 128 // Cout if lane_dense else 1
    # Row-tile granularity: multiple of 16 sublanes (bf16 packing) and, when
    # lane-dense, of 8*lane_rep so the pass-2 (rows, 128) view tiles cleanly.
    unit = max(16, 8 * lane_rep) if lane_dense else 16

    mm_dtype = jnp.bfloat16 if use_bf16 else jnp.float32
    itemsize = jnp.dtype(mm_dtype).itemsize

    def _pass1_bytes(t):
        return (2 * t * max(K, 128) * itemsize            # patch tiles (double-buffered)
                + 2 * max(K, 8) * max(Cout, 128) * itemsize   # weights
                + 2 * t * max(Cout, 128) * 4              # conv output tiles
                + 4 * 8 * max(Cout, 128) * 4)             # partial-stat tiles

    tm = max(unit, min(_round_up(tm_target, unit), _round_up(M, unit)))
    tm = (tm // unit) * unit
    # Shrink the pass-1 row tile if the double-buffered working set would blow
    # the VMEM budget (large Cin -> large K).
    while tm > unit and _pass1_bytes(tm) > _VMEM_CAP - (2 << 20):
        tm = max(unit, (tm // 2 // unit) * unit)

    Mp = _round_up(M, tm)
    grid1 = Mp // tm

    if Mp > M:
        # Zero patch rows produce exactly-zero conv rows (no bias), so padding
        # does not perturb the batch statistics; we divide by the true M below.
        patches = jnp.pad(patches, ((0, Mp - M), (0, 0)))

    p_mm = patches.astype(mm_dtype)
    w2d = weight_hwio.reshape(K, Cout).astype(mm_dtype)

    vmem1 = _vmem_limit(_pass1_bytes(tm))

    conv_out, part_sum, part_ssq = pl.pallas_call(
        conv_stats_kernel,
        out_shape=(
            jax.ShapeDtypeStruct((Mp, Cout), jnp.float32),
            jax.ShapeDtypeStruct((grid1 * 8, Cout), jnp.float32),
            jax.ShapeDtypeStruct((grid1 * 8, Cout), jnp.float32),
        ),
        grid_spec=pltpu.PrefetchScalarGridSpec(
            num_scalar_prefetch=0,
            grid=(grid1,),
            in_specs=[
                pl.BlockSpec((tm, K), lambda i: (i, 0)),
                pl.BlockSpec((K, Cout), lambda i: (0, 0)),
            ],
            out_specs=[
                pl.BlockSpec((tm, Cout), lambda i: (i, 0)),
                pl.BlockSpec((8, Cout), lambda i: (i, 0)),
                pl.BlockSpec((8, Cout), lambda i: (i, 0)),
            ],
        ),
        compiler_params=pltpu.CompilerParams(
            dimension_semantics=("parallel",),
            vmem_limit_bytes=vmem1),
    )(p_mm, w2d)

    # ---- tiny per-channel stat reduction + BN folding (plain JAX) ----
    ch_sum = jnp.sum(part_sum.reshape(grid1, 8, Cout)[:, 0, :], axis=0)
    ch_ssq = jnp.sum(part_ssq.reshape(grid1, 8, Cout)[:, 0, :], axis=0)
    m_f = jnp.float32(M)
    mean = ch_sum / m_f
    var = jnp.maximum(ch_ssq / m_f - mean * mean, 0.0)   # biased (training-mode BN)
    inv_std = jax.lax.rsqrt(var + EPS)
    scale = gamma.astype(jnp.float32) * inv_std
    shift = beta.astype(jnp.float32) - mean * scale

    # ---- Pass 2: lane-dense BN-apply + LeakyReLU ----
    if lane_dense:
        rows = (Mp * Cout) // 128
        width = 128
        y2d = conv_out.reshape(rows, width)              # row-major preserving view
        scale2d = jnp.tile(scale.reshape(1, Cout), (1, lane_rep))
        shift2d = jnp.tile(shift.reshape(1, Cout), (1, lane_rep))
    else:
        rows, width = Mp, Cout
        y2d = conv_out
        scale2d = scale.reshape(1, Cout)
        shift2d = shift.reshape(1, Cout)

    # Pick the pass-2 row tile independently of pass-1's tile: large blocks for
    # the mem-bound elementwise sweep (~1 MiB of f32 per input block).
    tr = _choose_row_tile(rows, target=2048)

    vmem2 = _vmem_limit(4 * tr * max(width, 128) * 4 + 4 * 8 * 128 * 4)

    out2d = pl.pallas_call(
        bn_lrelu_kernel,
        out_shape=jax.ShapeDtypeStruct((rows, width), jnp.float32),
        grid_spec=pltpu.PrefetchScalarGridSpec(
            num_scalar_prefetch=0,
            grid=(rows // tr,),
            in_specs=[
                pl.BlockSpec((tr, width), lambda i: (i, 0)),
                pl.BlockSpec((1, width), lambda i: (0, 0)),
                pl.BlockSpec((1, width), lambda i: (0, 0)),
            ],
            out_specs=pl.BlockSpec((tr, width), lambda i: (i, 0)),
        ),
        compiler_params=pltpu.CompilerParams(
            dimension_semantics=("parallel",),
            vmem_limit_bytes=vmem2),
        input_output_aliases={0: 0},            # overwrite conv_out in place
    )(y2d, scale2d, shift2d)

    out_mc = out2d.reshape(Mp, Cout)[:M]
    out_nhwc = out_mc.reshape(N, Ho, Wo, Cout)
    return jnp.transpose(out_nhwc, (0, 3, 1, 2))         # back to NCHW


# ----------------------------------------------------------------------------
# Pure-JAX reference (conv + bias + training-mode BN + LeakyReLU).
# ----------------------------------------------------------------------------
def reference_forward(x_nchw, weight_hwio, bias, gamma, beta):
    x_nhwc = jnp.transpose(x_nchw, (0, 2, 3, 1)).astype(jnp.float32)
    y = jax.lax.conv_general_dilated(
        x_nhwc, weight_hwio.astype(jnp.float32),
        window_strides=(2, 2), padding=((1, 1), (1, 1)),
        dimension_numbers=("NHWC", "HWIO", "NHWC"))
    y = y + bias.reshape(1, 1, 1, -1)
    mean = jnp.mean(y, axis=(0, 1, 2), keepdims=True)
    var = jnp.mean((y - mean) ** 2, axis=(0, 1, 2), keepdims=True)   # biased
    y = (y - mean) / jnp.sqrt(var + EPS) * gamma.reshape(1, 1, 1, -1) \
        + beta.reshape(1, 1, 1, -1)
    y = jnp.where(y > 0, y, NEG_SLOPE * y)
    return jnp.transpose(y, (0, 3, 1, 2))


if __name__ == "__main__":
    N, Cin, H, W = 2, 4, 16, 16
    Cout = 8

    key = jax.random.PRNGKey(0)
    kx, kw_, kb_ = jax.random.split(key, 3)

    x = jax.random.normal(kx, (N, Cin, H, W), dtype=jnp.float32)

    # Deterministic Conv2d params (PyTorch-style uniform bound), HWIO layout.
    fan_in = Cin * 4 * 4
    bound = 1.0 / math.sqrt(fan_in)
    weight = jax.random.uniform(kw_, (4, 4, Cin, Cout),
                                minval=-bound, maxval=bound, dtype=jnp.float32)
    bias = jax.random.uniform(kb_, (Cout,),
                              minval=-bound, maxval=bound, dtype=jnp.float32)
    gamma = jnp.ones((Cout,), jnp.float32)    # BatchNorm2d default init
    beta = jnp.zeros((Cout,), jnp.float32)

    fwd = jax.jit(down_light_forward, static_argnames=("tm_target", "use_bf16"))

    ref = reference_forward(x, weight, bias, gamma, beta)

    # bf16 MXU-operand path (production config): loose check vs f32 reference.
    out = jax.block_until_ready(fwd(x, weight, bias, gamma, beta))
    assert out.shape == (N, Cout, H // 2, W // 2), out.shape
    assert jnp.allclose(out, ref, atol=5e-2, rtol=5e-2), \
        float(jnp.max(jnp.abs(out - ref)))

    # Full-f32 matmul path: tight check of the kernel structure / BN semantics.
    out_f32 = jax.block_until_ready(
        fwd(x, weight, bias, gamma, beta, use_bf16=False))
    assert jnp.allclose(out_f32, ref, atol=1e-4, rtol=1e-4), \
        float(jnp.max(jnp.abs(out_f32 - ref)))

    print("KERNEL_OK")
</pallas_src>

<mosaic_0001>
module attributes {stable_mosaic.version = 11 : i64} {
  func.func @conv_stats_kernel(%arg0: i32, %arg1: memref<128x64xbf16, #tpu.memory_space<vmem>>, %arg2: memref<64x8xbf16, #tpu.memory_space<vmem>>, %arg3: memref<128x8xf32, #tpu.memory_space<vmem>>, %arg4: memref<8x8xf32, #tpu.memory_space<vmem>>, %arg5: memref<8x8xf32, #tpu.memory_space<vmem>>) attributes {dimension_semantics = [#tpu.dimension_semantics<parallel>], iteration_bounds = array<i64: 1>, scalar_prefetch = 0 : i64, scratch_operands = 0 : i64, tpu.core_type = #tpu.core_type<tc>, window_params = [{transform_indices = @transform_0, window_bounds = array<i64: 128, 64>}, {pipeline_mode = #tpu.pipeline_mode<synchronous>, transform_indices = @transform_1, window_bounds = array<i64: 64, 8>}, {transform_indices = @transform_2, window_bounds = array<i64: 128, 8>}, {transform_indices = @transform_3, window_bounds = array<i64: 8, 8>}, {transform_indices = @transform_4, window_bounds = array<i64: 8, 8>}]} {
    %c0 = arith.constant 0 : index
    %c0_0 = arith.constant 0 : index
    %0 = vector.load %arg1[%c0, %c0_0] : memref<128x64xbf16, #tpu.memory_space<vmem>>, vector<128x64xbf16>
    %c0_1 = arith.constant 0 : index
    %c0_2 = arith.constant 0 : index
    %1 = vector.load %arg2[%c0_1, %c0_2] : memref<64x8xbf16, #tpu.memory_space<vmem>>, vector<64x8xbf16>
    %cst = arith.constant dense<0.000000e+00> : vector<128x8xf32>
    %2 = tpu.matmul %0, %1, %cst {dimension_numbers = #tpu.dot_dimension_numbers<[1], [0], [0], [1], [0, 0, 1, 1], [], []>} : vector<128x64xbf16>, vector<64x8xbf16>, vector<128x8xf32> -> vector<128x8xf32>
    %c0_3 = arith.constant 0 : index
    %c0_4 = arith.constant 0 : index
    %3 = vector.load %arg3[%c0_3, %c0_4] : memref<128x8xf32, #tpu.memory_space<vmem>>, vector<128x8xf32>
    tpu.vector_store %arg3[%c0_3, %c0_4], %2 {strides = array<i32>} : memref<128x8xf32, #tpu.memory_space<vmem>>, vector<128x8xf32>,
    %cst_5 = arith.constant dense<0.000000e+00> : vector<8xf32>
    %4 = vector.multi_reduction <add>, %2, %cst_5 [0] : vector<128x8xf32> to vector<8xf32>
    %5 = vector.shape_cast %4 : vector<8xf32> to vector<1x8xf32>
    %6 = arith.mulf %2, %2 : vector<128x8xf32>
    %cst_6 = arith.constant dense<0.000000e+00> : vector<8xf32>
    %7 = vector.multi_reduction <add>, %6, %cst_6 [0] : vector<128x8xf32> to vector<8xf32>
    %8 = vector.shape_cast %7 : vector<8xf32> to vector<1x8xf32>
    %9 = vector.shape_cast %5 : vector<1x8xf32> to vector<1x8xf32>
    %10 = vector.broadcast %9 : vector<1x8xf32> to vector<8x8xf32>
    %c0_7 = arith.constant 0 : index
    %c0_8 = arith.constant 0 : index
    %11 = vector.load %arg4[%c0_7, %c0_8] : memref<8x8xf32, #tpu.memory_space<vmem>>, vector<8x8xf32>
    tpu.vector_store %arg4[%c0_7, %c0_8], %10 {strides = array<i32>} : memref<8x8xf32, #tpu.memory_space<vmem>>, vector<8x8xf32>,
    %12 = vector.shape_cast %8 : vector<1x8xf32> to vector<1x8xf32>
    %13 = vector.broadcast %12 : vector<1x8xf32> to vector<8x8xf32>
    %c0_9 = arith.constant 0 : index
    %c0_10 = arith.constant 0 : index
    %14 = vector.load %arg5[%c0_9, %c0_10] : memref<8x8xf32, #tpu.memory_space<vmem>>, vector<8x8xf32>
    tpu.vector_store %arg5[%c0_9, %c0_10], %13 {strides = array<i32>} : memref<8x8xf32, #tpu.memory_space<vmem>>, vector<8x8xf32>,
    return
  }
  func.func @transform_0(%arg0: i32) -> (i32, i32) {
    %c0_i32 = arith.constant 0 : i32
    %c0_i32_0 = arith.constant 0 : i32
    return %arg0, %c0_i32 : i32, i32
  }
  func.func @transform_1(%arg0: i32) -> (i32, i32) {
    %c0_i32 = arith.constant 0 : i32
    %c0_i32_0 = arith.constant 0 : i32
    %c0_i32_1 = arith.constant 0 : i32
    return %c0_i32, %c0_i32_0 : i32, i32
  }
  func.func @transform_2(%arg0: i32) -> (i32, i32) {
    %c0_i32 = arith.constant 0 : i32
    %c0_i32_0 = arith.constant 0 : i32
    return %arg0, %c0_i32 : i32, i32
  }
  func.func @transform_3(%arg0: i32) -> (i32, i32) {
    %c0_i32 = arith.constant 0 : i32
    %c0_i32_0 = arith.constant 0 : i32
    return %arg0, %c0_i32 : i32, i32
  }
  func.func @transform_4(%arg0: i32) -> (i32, i32) {
    %c0_i32 = arith.constant 0 : i32
    %c0_i32_0 = arith.constant 0 : i32
    return %arg0, %c0_i32 : i32, i32
  }
}

module attributes {stable_mosaic.version = 11 : i64} {
  func.func @bn_lrelu_kernel(%arg0: i32, %arg1: memref<8x128xf32, #tpu.memory_space<vmem>>, %arg2: memref<1x128xf32, #tpu.memory_space<vmem>>, %arg3: memref<1x128xf32, #tpu.memory_space<vmem>>, %arg4: memref<8x128xf32, #tpu.memory_space<vmem>>) attributes {dimension_semantics = [#tpu.dimension_semantics<parallel>], iteration_bounds = array<i64: 1>, scalar_prefetch = 0 : i64, scratch_operands = 0 : i64, tpu.core_type = #tpu.core_type<tc>, window_params = [{transform_indices = @transform_0, window_bounds = array<i64: 8, 128>}, {pipeline_mode = #tpu.pipeline_mode<synchronous>, transform_indices = @transform_1, window_bounds = array<i64: 1, 128>}, {pipeline_mode = #tpu.pipeline_mode<synchronous>, transform_indices = @transform_2, window_bounds = array<i64: 1, 128>}, {transform_indices = @transform_3, window_bounds = array<i64: 8, 128>}]} {
    %c0 = arith.constant 0 : index
    %c0_0 = arith.constant 0 : index
    %0 = vector.load %arg1[%c0, %c0_0] : memref<8x128xf32, #tpu.memory_space<vmem>>, vector<8x128xf32>
    %c0_1 = arith.constant 0 : index
    %c0_2 = arith.constant 0 : index
    %1 = vector.load %arg2[%c0_1, %c0_2] : memref<1x128xf32, #tpu.memory_space<vmem>>, vector<1x128xf32>
    %2 = vector.broadcast %1 : vector<1x128xf32> to vector<8x128xf32>
    %3 = arith.mulf %0, %2 : vector<8x128xf32>
    %c0_3 = arith.constant 0 : index
    %c0_4 = arith.constant 0 : index
    %4 = vector.load %arg3[%c0_3, %c0_4] : memref<1x128xf32, #tpu.memory_space<vmem>>, vector<1x128xf32>
    %5 = vector.broadcast %4 : vector<1x128xf32> to vector<8x128xf32>
    %6 = arith.addf %3, %5 : vector<8x128xf32>
    %cst = arith.constant 0.000000e+00 : f32
    %7 = vector.broadcast %cst : f32 to vector<8x128xf32>
    %8 = arith.cmpf ogt, %6, %7 : vector<8x128xf32>
    %cst_5 = arith.constant 1.000000e-01 : f32
    %9 = vector.broadcast %cst_5 : f32 to vector<8x128xf32>
    %10 = arith.mulf %9, %6 : vector<8x128xf32>
    %11 = arith.select %8, %6, %10 : vector<8x128xi1>, vector<8x128xf32>
    %c0_6 = arith.constant 0 : index
    %c0_7 = arith.constant 0 : index
    %12 = vector.load %arg4[%c0_6, %c0_7] : memref<8x128xf32, #tpu.memory_space<vmem>>, vector<8x128xf32>
    tpu.vector_store %arg4[%c0_6, %c0_7], %11 {strides = array<i32>} : memref<8x128xf32, #tpu.memory_space<vmem>>, vector<8x128xf32>,
    return
  }
  func.func @transform_0(%arg0: i32) -> (i32, i32) {
    %c0_i32 = arith.constant 0 : i32
    %c0_i32_0 = arith.constant 0 : i32
    return %arg0, %c0_i32 : i32, i32
  }
  func.func @transform_1(%arg0: i32) -> (i32, i32) {
    %c0_i32 = arith.constant 0 : i32
    %c0_i32_0 = arith.constant 0 : i32
    %c0_i32_1 = arith.constant 0 : i32
    return %c0_i32, %c0_i32_0 : i32, i32
  }
  func.func @transform_2(%arg0: i32) -> (i32, i32) {
    %c0_i32 = arith.constant 0 : i32
    %c0_i32_0 = arith.constant 0 : i32
    %c0_i32_1 = arith.constant 0 : i32
    return %c0_i32, %c0_i32_0 : i32, i32
  }
  func.func @transform_3(%arg0: i32) -> (i32, i32) {
    %c0_i32 = arith.constant 0 : i32
    %c0_i32_0 = arith.constant 0 : i32
    return %arg0, %c0_i32 : i32, i32
  }
}

</mosaic_0001>

<llo_original>
// kernel: down_light_forward.3
$region0: #{down_light_forward.3}
  #allocation0 [shape = 'u32[]', space=smem, size = 0x4, offset = 0x4, fixed_abs, tag = 'smem constant byte address 0x4 - core index']
  #allocation1 [shape = 'u32[144,128]{1,0:T(1,128)}', space=vmem, size = 0x12000, scoped, tag = 'internal scratch']
  %s0 = inlined_call_operand.vmem [shape: f32[8,128], index: 0, kind: input, shape index: {}, may-alias: {0,3}]
  %s1 = inlined_call_operand.vmem [shape: f32[1,128], index: 1, kind: input, shape index: {}]
  %s2 = inlined_call_operand.vmem [shape: f32[1,128], index: 2, kind: input, shape index: {}]
  %s3 = inlined_call_operand.vmem [shape: f32[8,128], index: 3, kind: output, shape index: {}, may-alias: {0,3}]
  %s4 = sld [smem:[#allocation0]]
  $region22: #{down_light_forward.3} parent=0
    _
  %s6 = ssub.s32 1, %s4
  %s7 = scalar_select 0, %s6, %s4
  // Predicated region
  $region2: #{down_light_forward.3} parent=0 // pred_check
    _
  $region3: #{down_light_forward.3} parent=0 // pred_check_branch
    %9 = sbr.rel (0) target = $region5
  $region4: #{down_light_forward.3} parent=0 // pred_region
    _
  $region5: #{down_light_forward.3} parent=0 // pred_fallthru
    _
  // Predicated region
  $region6: #{down_light_forward.3} parent=0 // pred_check
    _
  $region7: #{down_light_forward.3} parent=0 // pred_check_branch
    %11 = sbr.rel (0) target = $region9
  $region8: #{down_light_forward.3} parent=0 // pred_region
    _
  $region9: #{down_light_forward.3} parent=0 // pred_fallthru
    _
  // Predicated region
  $region10: #{down_light_forward.3} parent=0 // pred_check
    _
  $region11: #{down_light_forward.3} parent=0 // pred_check_branch
    %13 = sbr.rel (0) target = $region13
  $region12: #{down_light_forward.3} parent=0 // pred_region
    _
  $region13: #{down_light_forward.3} parent=0 // pred_fallthru
    _
  %v14 = vld [vmem:[%s0] sm:$0xff]
  %v15 = vld [vmem:[%s1] sm:$0x1]
  %v17 = vlaneseq
  %v18 = vshrl.u32 %v17, 7
  %v19 = vsub.s32 0, %v18
  %v20 = vrot.slane %v15, %v19
  %v22 = vmul.f32 %v14, %v20
  %v23 = vld [vmem:[%s2] sm:$0x1]
  %v25 = vlaneseq
  %v26 = vshrl.u32 %v25, 7
  %v27 = vsub.s32 0, %v26
  %v28 = vrot.slane %v23, %v27
  %v30 = vadd.f32 %v22, %v28
  %vm31 = vcmp.gt.f32.partialorder %v30, 0.0
  %v32 = vmul.f32 %v30, 0.1
  %v33 = vsel %vm31, %v30, %v32
  %34 = vst [vmem:[%s3] sm:$0xff] %v33
  // Predicated region
  $region14: #{down_light_forward.3} parent=0 // pred_check
    _
  $region15: #{down_light_forward.3} parent=0 // pred_check_branch
    %36 = sbr.rel (0) target = $region17
  $region16: #{down_light_forward.3} parent=0 // pred_region
    _
  $region17: #{down_light_forward.3} parent=0 // pred_fallthru
    _
  // Predicated region
  $region18: #{down_light_forward.3} parent=0 // pred_check
    _
  $region19: #{down_light_forward.3} parent=0 // pred_check_branch
    %38 = sbr.rel (0) target = $region21
  $region20: #{down_light_forward.3} parent=0 // pred_region
    _
  $region21: #{down_light_forward.3} parent=0 // pred_fallthru
    _

// kernel: down_light_forward.2
$region0: #{down_light_forward.2}
  #allocation0 [shape = 'u32[]', space=smem, size = 0x4, offset = 0x4, fixed_abs, tag = 'smem constant byte address 0x4 - core index']
  #allocation1 [shape = 'u32[144,128]{1,0:T(1,128)}', space=vmem, size = 0x12000, scoped, tag = 'internal scratch']
  %s0 = inlined_call_operand.vmem [shape: bf16[128,64], index: 0, kind: input, shape index: {}]
  %s1 = inlined_call_operand.vmem [shape: bf16[64,8], index: 1, kind: input, shape index: {}]
  %s2 = inlined_call_operand.vmem [shape: f32[128,8], index: 2, kind: output, shape index: {0}]
  %s3 = inlined_call_operand.vmem [shape: f32[8,8], index: 3, kind: output, shape index: {1}]
  %s4 = inlined_call_operand.vmem [shape: f32[8,8], index: 4, kind: output, shape index: {2}]
  %5 = xla_tuple %s2, %s3, %s4
  %s6 = sld [smem:[#allocation0]]
  $region34: #{down_light_forward.2} parent=0
    _
  %s8 = ssub.s32 1, %s6
  %s9 = scalar_select 0, %s8, %s6
  // Predicated region
  $region2: #{down_light_forward.2} parent=0 // pred_check
    _
  $region3: #{down_light_forward.2} parent=0 // pred_check_branch
    %11 = sbr.rel (0) target = $region5
  $region4: #{down_light_forward.2} parent=0 // pred_region
    _
  $region5: #{down_light_forward.2} parent=0 // pred_fallthru
    _
  // Predicated region
  $region6: #{down_light_forward.2} parent=0 // pred_check
    _
  $region7: #{down_light_forward.2} parent=0 // pred_check_branch
    %13 = sbr.rel (0) target = $region9
  $region8: #{down_light_forward.2} parent=0 // pred_region
    _
  $region9: #{down_light_forward.2} parent=0 // pred_fallthru
    _
  %v15 = vld [vmem:[%s0] sm:$0xf]
  %v16 = vld [vmem:[%s0 + $0x4] sm:$0xf]
  %v17 = vld [vmem:[%s0 + $0x8] sm:$0xf]
  %v18 = vld [vmem:[%s0 + $0xc] sm:$0xf]
  %v19 = vld [vmem:[%s0 + $0x10] sm:$0xf]
  %v20 = vld [vmem:[%s0 + $0x14] sm:$0xf]
  %v21 = vld [vmem:[%s0 + $0x18] sm:$0xf]
  %v22 = vld [vmem:[%s0 + $0x1c] sm:$0xf]
  %v23 = vld [vmem:[%s0 + $0x20] sm:$0xf]
  %v24 = vld [vmem:[%s0 + $0x24] sm:$0xf]
  %v25 = vld [vmem:[%s0 + $0x28] sm:$0xf]
  %v26 = vld [vmem:[%s0 + $0x2c] sm:$0xf]
  %v27 = vld [vmem:[%s0 + $0x30] sm:$0xf]
  %v28 = vld [vmem:[%s0 + $0x34] sm:$0xf]
  %v29 = vld [vmem:[%s0 + $0x38] sm:$0xf]
  %v30 = vld [vmem:[%s0 + $0x3c] sm:$0xf]
  %v31 = vld [vmem:[%s1] sm:$0xf]
  %v32 = vld [vmem:[%s1 + $0x4] sm:$0xf]
  %v33 = vld [vmem:[%s1 + $0x8] sm:$0xf]
  %v34 = vld [vmem:[%s1 + $0xc] sm:$0xf]
  %v35 = vld [vmem:[%s1 + $0x10] sm:$0xf]
  %v36 = vld [vmem:[%s1 + $0x14] sm:$0xf]
  %v37 = vld [vmem:[%s1 + $0x18] sm:$0xf]
  %v38 = vld [vmem:[%s1 + $0x1c] sm:$0xf]
  %v55 = vunpack.c.l.b16 %v15
  %v56 = vunpack.c.l.b16 %v16
  %v57 = vunpack.c.l.b16 %v17
  %v58 = vunpack.c.l.b16 %v18
  %v59 = vunpack.c.l.b16 %v19
  %v60 = vunpack.c.l.b16 %v20
  %v61 = vunpack.c.l.b16 %v21
  %v62 = vunpack.c.l.b16 %v22
  %v63 = vunpack.c.l.b16 %v23
  %v64 = vunpack.c.l.b16 %v24
  %v65 = vunpack.c.l.b16 %v25
  %v66 = vunpack.c.l.b16 %v26
  %v67 = vunpack.c.l.b16 %v27
  %v68 = vunpack.c.l.b16 %v28
  %v69 = vunpack.c.l.b16 %v29
  %v70 = vunpack.c.l.b16 %v30
  %v71 = vpack.c.b16 %v56, %v55
  %v72 = vpack.c.b16 %v58, %v57
  %v73 = vpack.c.b16 %v60, %v59
  %v74 = vpack.c.b16 %v62, %v61
  %v75 = vpack.c.b16 %v64, %v63
  %v76 = vpack.c.b16 %v66, %v65
  %v77 = vpack.c.b16 %v68, %v67
  %v78 = vpack.c.b16 %v70, %v69
  %v87 = vunpack.c.l.b16 %v31
  %v88 = vunpack.c.l.b16 %v32
  %v89 = vunpack.c.l.b16 %v33
  %v90 = vunpack.c.l.b16 %v34
  %v91 = vunpack.c.l.b16 %v35
  %v92 = vunpack.c.l.b16 %v36
  %v93 = vunpack.c.l.b16 %v37
  %v94 = vunpack.c.l.b16 %v38
  %v95 = vpack.c.b16 %v88, %v87
  %v96 = vpack.c.b16 %v90, %v89
  %v97 = vpack.c.b16 %v92, %v91
  %v98 = vpack.c.b16 %v94, %v93
  %vm103 = vcmask 523264
  %v105 = vsel %vm103, %v71, 0
  %v108 = vsel %vm103, %v72, 0
  %v111 = vsel %vm103, %v73, 0
  %v114 = vsel %vm103, %v74, 0
  %v117 = vsel %vm103, %v75, 0
  %v120 = vsel %vm103, %v76, 0
  %v123 = vsel %vm103, %v77, 0
  %v126 = vsel %vm103, %v78, 0
  %128 = vmatprep.subr.bf16.mxu0 0
  %129 = vmatpush1.bf16.msra.mxu0 0
  %130 = vmatprep.subr.bf16.mxu0 0
  %131 = vmatpush1.bf16.msra.mxu0 0
  %132 = vmatprep.subr.bf16.mxu0 0
  %133 = vmatpush1.bf16.msra.mxu0 0
  %134 = vmatprep.subr.bf16.mxu0 0
  %135 = vmatpush1.bf16.msra.mxu0 0
  %136 = vmatprep.subr.bf16.mxu0 0
  %137 = vmatpush1.bf16.msra.mxu0 %v98
  %138 = vmatprep.subr.bf16.mxu0 0
  %139 = vmatpush1.bf16.msra.mxu0 %v97
  %140 = vmatprep.subr.bf16.mxu0 0
  %141 = vmatpush1.bf16.msra.mxu0 %v96
  %142 = vmatprep.subr.bf16.mxu0 0
  %143 = vmatpush1.bf16.msra.mxu0 %v95
  %144 = vmatprep.subr.bf16.mxu0 0
  %145 = vmatpush2.bf16.msra.mxu0 0
  %146 = vmatprep.subr.bf16.mxu0 0
  %147 = vmatpush2.bf16.msra.mxu0 0
  %148 = vmatprep.subr.bf16.mxu0 0
  %149 = vmatpush2.bf16.msra.mxu0 0
  %150 = vmatprep.subr.bf16.mxu0 0
  %151 = vmatpush2.bf16.msra.mxu0 0
  %152 = vmatprep.subr.bf16.mxu0 0
  %153 = vmatpush2.bf16.msra.mxu0 0
  %154 = vmatprep.subr.bf16.mxu0 0
  %155 = vmatpush2.bf16.msra.mxu0 0
  %156 = vmatprep.subr.bf16.mxu0 0
  %157 = vmatpush2.bf16.msra.mxu0 0
  %158 = vmatprep.subr.bf16.mxu0 0
  %159 = vmatpush2.bf16.msra.mxu0 0
  %160 = vmatprep.mubr.bf16.mxu0 0
  %161 = vmatmul.mubr.bf16.gmra.mxu0 %v105
  %v162 = vpop.f32.mrf.mxu0
  %v163 = vadd.f32 0.0, %v162
  %v164 = vpop.f32.mrf.mxu0
  %v165 = vpop.f32.mrf.mxu0
  %v166 = vadd.f32 0.0, %v165
  %v167 = vpop.f32.mrf.mxu0
  %168 = vmatprep.mubr.bf16.mxu0 0
  %169 = vmatmul.mubr.bf16.gmra.mxu0 %v108
  %v170 = vpop.f32.mrf.mxu0
  %v171 = vadd.f32 0.0, %v170
  %v172 = vpop.f32.mrf.mxu0
  %v173 = vpop.f32.mrf.mxu0
  %v174 = vadd.f32 0.0, %v173
  %v175 = vpop.f32.mrf.mxu0
  %176 = vmatprep.mubr.bf16.mxu0 0
  %177 = vmatmul.mubr.bf16.gmra.mxu0 %v111
  %v178 = vpop.f32.mrf.mxu0
  %v179 = vadd.f32 0.0, %v178
  %v180 = vpop.f32.mrf.mxu0
  %v181 = vpop.f32.mrf.mxu0
  %v182 = vadd.f32 0.0, %v181
  %v183 = vpop.f32.mrf.mxu0
  %184 = vmatprep.mubr.bf16.mxu0 0
  %185 = vmatmul.mubr.bf16.gmra.mxu0 %v114
  %v186 = vpop.f32.mrf.mxu0
  %v187 = vadd.f32 0.0, %v186
  %v188 = vpop.f32.mrf.mxu0
  %v189 = vpop.f32.mrf.mxu0
  %v190 = vadd.f32 0.0, %v189
  %v191 = vpop.f32.mrf.mxu0
  %192 = vmatprep.mubr.bf16.mxu0 0
  %193 = vmatmul.mubr.bf16.gmra.mxu0 %v117
  %v194 = vpop.f32.mrf.mxu0
  %v195 = vadd.f32 0.0, %v194
  %v196 = vpop.f32.mrf.mxu0
  %v197 = vpop.f32.mrf.mxu0
  %v198 = vadd.f32 0.0, %v197
  %v199 = vpop.f32.mrf.mxu0
  %200 = vmatprep.mubr.bf16.mxu0 0
  %201 = vmatmul.mubr.bf16.gmra.mxu0 %v120
  %v202 = vpop.f32.mrf.mxu0
  %v203 = vadd.f32 0.0, %v202
  %v204 = vpop.f32.mrf.mxu0
  %v205 = vpop.f32.mrf.mxu0
  %v206 = vadd.f32 0.0, %v205
  %v207 = vpop.f32.mrf.mxu0
  %208 = vmatprep.mubr.bf16.mxu0 0
  %209 = vmatmul.mubr.bf16.gmra.mxu0 %v123
  %v210 = vpop.f32.mrf.mxu0
  %v211 = vadd.f32 0.0, %v210
  %v212 = vpop.f32.mrf.mxu0
  %v213 = vpop.f32.mrf.mxu0
  %v214 = vadd.f32 0.0, %v213
  %v215 = vpop.f32.mrf.mxu0
  %216 = vmatprep.mubr.bf16.mxu0 0
  %217 = vmatmul.mubr.bf16.gmra.mxu0 %v126
  %v218 = vpop.f32.mrf.mxu0
  %v219 = vadd.f32 0.0, %v218
  %v220 = vpop.f32.mrf.mxu0
  %v221 = vpop.f32.mrf.mxu0
  %v222 = vadd.f32 0.0, %v221
  %v223 = vpop.f32.mrf.mxu0
  %224 = vdwg.mxu0
  %vm225 = vcmask 64512
  %226 = vst.msk [vmem:[%s2] sm:$0xff] %vm225, %v163
  %227 = vst.msk [vmem:[%s2 + $0x8] sm:$0xff] %vm225, %v166
  %228 = vst.msk [vmem:[%s2 + $0x10] sm:$0xff] %vm225, %v171
  %229 = vst.msk [vmem:[%s2 + $0x18] sm:$0xff] %vm225, %v174
  %230 = vst.msk [vmem:[%s2 + $0x20] sm:$0xff] %vm225, %v179
  %231 = vst.msk [vmem:[%s2 + $0x28] sm:$0xff] %vm225, %v182
  %232 = vst.msk [vmem:[%s2 + $0x30] sm:$0xff] %vm225, %v187
  %233 = vst.msk [vmem:[%s2 + $0x38] sm:$0xff] %vm225, %v190
  %234 = vst.msk [vmem:[%s2 + $0x40] sm:$0xff] %vm225, %v195
  %235 = vst.msk [vmem:[%s2 + $0x48] sm:$0xff] %vm225, %v198
  %236 = vst.msk [vmem:[%s2 + $0x50] sm:$0xff] %vm225, %v203
  %237 = vst.msk [vmem:[%s2 + $0x58] sm:$0xff] %vm225, %v206
  %238 = vst.msk [vmem:[%s2 + $0x60] sm:$0xff] %vm225, %v211
  %239 = vst.msk [vmem:[%s2 + $0x68] sm:$0xff] %vm225, %v214
  %240 = vst.msk [vmem:[%s2 + $0x70] sm:$0xff] %vm225, %v219
  %241 = vst.msk [vmem:[%s2 + $0x78] sm:$0xff] %vm225, %v222
  %v242 = vsel %vm225, %v163, 0.0
  %v243 = vsel %vm225, %v166, 0.0
  %v244 = vadd.f32 %v242, %v243
  %v245 = vsel %vm225, %v171, 0.0
  %v246 = vadd.f32 %v244, %v245
  %v247 = vsel %vm225, %v174, 0.0
  %v248 = vadd.f32 %v246, %v247
  %v249 = vsel %vm225, %v179, 0.0
  %v250 = vadd.f32 %v248, %v249
  %v251 = vsel %vm225, %v182, 0.0
  %v252 = vadd.f32 %v250, %v251
  %v253 = vsel %vm225, %v187, 0.0
  %v254 = vadd.f32 %v252, %v253
  %v255 = vsel %vm225, %v190, 0.0
  %v256 = vadd.f32 %v254, %v255
  %v257 = vsel %vm225, %v195, 0.0
  %v258 = vadd.f32 %v256, %v257
  %v259 = vsel %vm225, %v198, 0.0
  %v260 = vadd.f32 %v258, %v259
  %v261 = vsel %vm225, %v203, 0.0
  %v262 = vadd.f32 %v260, %v261
  %v263 = vsel %vm225, %v206, 0.0
  %v264 = vadd.f32 %v262, %v263
  %v265 = vsel %vm225, %v211, 0.0
  %v266 = vadd.f32 %v264, %v265
  %v267 = vsel %vm225, %v214, 0.0
  %v268 = vadd.f32 %v266, %v267
  %v269 = vsel %vm225, %v219, 0.0
  %v270 = vadd.f32 %v268, %v269
  %v271 = vsel %vm225, %v222, 0.0
  %v272 = vadd.f32 %v270, %v271
  %v273 = vrot.slane %v272, 4
  %v274 = vadd.f32 %v272, %v273
  %v275 = vrot.slane %v274, 2
  %v276 = vadd.f32 %v274, %v275
  %v277 = vrot.slane %v276, 1
  %v278 = vadd.f32 %v276, %v277
  %v279 = vmul.f32 %v163, %v163
  %v280 = vmul.f32 %v166, %v166
  %v281 = vmul.f32 %v171, %v171
  %v282 = vmul.f32 %v174, %v174
  %v283 = vmul.f32 %v179, %v179
  %v284 = vmul.f32 %v182, %v182
  %v285 = vmul.f32 %v187, %v187
  %v286 = vmul.f32 %v190, %v190
  %v287 = vmul.f32 %v195, %v195
  %v288 = vmul.f32 %v198, %v198
  %v289 = vmul.f32 %v203, %v203
  %v290 = vmul.f32 %v206, %v206
  %v291 = vmul.f32 %v211, %v211
  %v292 = vmul.f32 %v214, %v214
  %v293 = vmul.f32 %v219, %v219
  %v294 = vmul.f32 %v222, %v222
  %v295 = vsel %vm225, %v279, 0.0
  %v296 = vsel %vm225, %v280, 0.0
  %v297 = vadd.f32 %v295, %v296
  %v298 = vsel %vm225, %v281, 0.0
  %v299 = vadd.f32 %v297, %v298
  %v300 = vsel %vm225, %v282, 0.0
  %v301 = vadd.f32 %v299, %v300
  %v302 = vsel %vm225, %v283, 0.0
  %v303 = vadd.f32 %v301, %v302
  %v304 = vsel %vm225, %v284, 0.0
  %v305 = vadd.f32 %v303, %v304
  %v306 = vsel %vm225, %v285, 0.0
  %v307 = vadd.f32 %v305, %v306
  %v308 = vsel %vm225, %v286, 0.0
  %v309 = vadd.f32 %v307, %v308
  %v310 = vsel %vm225, %v287, 0.0
  %v311 = vadd.f32 %v309, %v310
  %v312 = vsel %vm225, %v288, 0.0
  %v313 = vadd.f32 %v311, %v312
  %v314 = vsel %vm225, %v289, 0.0
  %v315 = vadd.f32 %v313, %v314
  %v316 = vsel %vm225, %v290, 0.0
  %v317 = vadd.f32 %v315, %v316
  %v318 = vsel %vm225, %v291, 0.0
  %v319 = vadd.f32 %v317, %v318
  %v320 = vsel %vm225, %v292, 0.0
  %v321 = vadd.f32 %v319, %v320
  %v322 = vsel %vm225, %v293, 0.0
  %v323 = vadd.f32 %v321, %v322
  %v324 = vsel %vm225, %v294, 0.0
  %v325 = vadd.f32 %v323, %v324
  %v326 = vrot.slane %v325, 4
  %v327 = vadd.f32 %v325, %v326
  %v328 = vrot.slane %v327, 2
  %v329 = vadd.f32 %v327, %v328
  %v330 = vrot.slane %v329, 1
  %v331 = vadd.f32 %v329, %v330
  %332 = vst.msk [vmem:[%s3] sm:$0xff] %vm225, %v278
  %333 = vst.msk [vmem:[%s4] sm:$0xff] %vm225, %v331
  // Predicated region
  $region10: #{down_light_forward.2} parent=0 // pred_check
    _
  $region11: #{down_light_forward.2} parent=0 // pred_check_branch
    %335 = sbr.rel (0) target = $region13
  $region12: #{down_light_forward.2} parent=0 // pred_region
    _
  $region13: #{down_light_forward.2} parent=0 // pred_fallthru
    _
  // Predicated region
  $region14: #{down_light_forward.2} parent=0 // pred_check
    _
  $region15: #{down_light_forward.2} parent=0 // pred_check_branch
    %337 = sbr.rel (0) target = $region17
  $region16: #{down_light_forward.2} parent=0 // pred_region
    _
  $region17: #{down_light_forward.2} parent=0 // pred_fallthru
    _
  // Predicated region
  $region18: #{down_light_forward.2} parent=0 // pred_check
    _
  $region19: #{down_light_forward.2} parent=0 // pred_check_branch
    %339 = sbr.rel (0) target = $region21
  $region20: #{down_light_forward.2} parent=0 // pred_region
    _
  $region21: #{down_light_forward.2} parent=0 // pred_fallthru
    _
  // Predicated region
  $region22: #{down_light_forward.2} parent=0 // pred_check
    _
  $region23: #{down_light_forward.2} parent=0 // pred_check_branch
    %341 = sbr.rel (0) target = $region25
  $region24: #{down_light_forward.2} parent=0 // pred_region
    _
  $region25: #{down_light_forward.2} parent=0 // pred_fallthru
    _
  // Predicated region
  $region26: #{down_light_forward.2} parent=0 // pred_check
    _
  $region27: #{down_light_forward.2} parent=0 // pred_check_branch
    %343 = sbr.rel (0) target = $region29
  $region28: #{down_light_forward.2} parent=0 // pred_region
    _
  $region29: #{down_light_forward.2} parent=0 // pred_fallthru
    _
  // Predicated region
  $region30: #{down_light_forward.2} parent=0 // pred_check
    _
  $region31: #{down_light_forward.2} parent=0 // pred_check_branch
    %345 = sbr.rel (0) target = $region33
  $region32: #{down_light_forward.2} parent=0 // pred_region
    _
  $region33: #{down_light_forward.2} parent=0 // pred_fallthru
    _

</llo_original>
